<compile_context>
chip_gen: v6e
topology: v6e:2x2x1
jax: 0.10.0
libtpu: 0.0.40
codegen_flags: <defaults>
</compile_context>

<pallas_src>
import functools

import jax
import jax.numpy as jnp
from jax.experimental import pallas as pl
from jax.experimental.pallas import tpu as pltpu

_BN_EPS = 1e-5
_LANE = 128


def _round_up(n, m):
    return ((n + m - 1) // m) * m


def _fused_mlp_kernel(*refs, plan, half_relu_dim):
    """Fused MLP forward.

    plan: tuple of (has_bn, do_relu) per layer (static).
    Ref order: x, then per-layer params (W[bf16], then gamma+beta if BN else bias),
    then the output ref.  Everything lives in VMEM; only the final (lane-dense)
    activation is stored to HBM.
    """
    x_ref = refs[0]
    o_ref = refs[-1]
    params = refs[1:-1]

    h = x_ref[...].astype(jnp.float32)
    idx = 0
    for has_bn, do_relu in plan:
        w = params[idx][...]                 # already bf16; no in-kernel cast pass
        idx += 1
        # bf16 operands -> full-rate MXU on all generations; f32 accumulation.
        y = jnp.dot(h.astype(jnp.bfloat16), w, preferred_element_type=jnp.float32)
        if has_bn:
            # Linear bias omitted by the wrapper: it cancels exactly in (y - mean).
            gamma = params[idx][...]
            beta = params[idx + 1][...]
            idx += 2
            mean = jnp.mean(y, axis=0, keepdims=True)
            # Clamp: E[y^2] - E[y]^2 can go slightly negative in f32.
            var = jnp.maximum(
                jnp.mean(y * y, axis=0, keepdims=True) - mean * mean, 0.0)
            # Fold BN into ONE full-tile affine; all (1,N) row math is cheap.
            scale = gamma * jax.lax.rsqrt(var + _BN_EPS)
            shift = beta - mean * scale
            y = y * scale + shift
        else:
            b = params[idx][...]
            idx += 1
            y = y + b
        if do_relu:
            y = jnp.maximum(y, 0.0)
        h = y

    if half_relu_dim is not None:
        # last_layer_act == 'ReLU': ReLU only on the first half of the TRUE output
        # columns.  (1, N) row mask broadcast over the batch; split point is not
        # lane-aligned so slice+concat would be strictly worse.
        col = jax.lax.broadcasted_iota(jnp.int32, (1, h.shape[1]), 1)
        h = jnp.where(col < half_relu_dim, jnp.maximum(h, 0.0), h)

    o_ref[...] = h.astype(o_ref.dtype)


def prepare_mlp_params(params, *, batch_norm=True, weight_dtype=jnp.bfloat16):
    """One-time prep (do NOT call per forward).

    * Pads the last layer's W/b columns to a multiple of 128 (lane-dense final store).
    * Casts weights to bf16 for storage (halves weight DMA + resident VMEM).
    * Drops the Linear bias on BN layers (cancels in the mean subtraction).
    """
    n_layers = len(params)
    d_out_true = params[-1][0].shape[1]
    d_out_pad = _round_up(d_out_true, _LANE)

    plan = []
    flat = []
    for s, (w, b, gamma, beta) in enumerate(params):
        is_last = s == n_layers - 1
        has_bn = batch_norm and not is_last
        do_relu = not is_last
        if is_last:
            pad = d_out_pad - d_out_true
            if pad:
                w = jnp.pad(w, ((0, 0), (0, pad)))
                b = jnp.pad(b, ((0, 0), (0, pad)))
        plan.append((has_bn, do_relu))
        flat.append(jnp.asarray(w, weight_dtype))
        if has_bn:
            flat.append(jnp.asarray(gamma, jnp.float32))
            flat.append(jnp.asarray(beta, jnp.float32))
        else:
            flat.append(jnp.asarray(b, jnp.float32))
    flat = [jax.device_put(a) for a in flat]
    return {
        "plan": tuple(plan),
        "flat": tuple(flat),
        "d_out_true": d_out_true,
        "d_out_pad": d_out_pad,
    }


def _vmem_limit_bytes(inputs, out_bytes):
    """Budget scoped VMEM from actual buffer sizes, capped by device capacity."""
    in_bytes = sum(int(a.size) * a.dtype.itemsize for a in inputs)
    # Gridless call: each buffer resident (Pallas may still double-buffer) plus
    # compiler scratch headroom for the intermediate activations.
    need = 2 * (in_bytes + out_bytes) + (4 << 20)
    try:
        cap = int(pltpu.get_tpu_info().vmem_capacity_bytes)
    except Exception:  # pragma: no cover - conservative fallback
        cap = 64 << 20  # v7x has the smallest per-TC VMEM across generations
    return int(max(16 << 20, min(need, cap * 3 // 4)))


def mlp_forward(x, prepped, *, last_layer_act="linear", out_dtype=jnp.float32):
    """Run the entire MLP as a single fused pallas_call.

    prepped: output of prepare_mlp_params().  Weights are stored
    (in_features, out_features) so y = x @ W + b matches PyTorch's x @ W.T with
    its (out, in) storage.
    """
    if last_layer_act not in ("linear", "ReLU"):
        raise ValueError("last_layer_act must be 'linear' or 'ReLU'")

    batch = x.shape[0]
    d_out_true = prepped["d_out_true"]
    d_out_pad = prepped["d_out_pad"]

    inputs = (x,) + prepped["flat"]
    # All operands are 2-D and passed whole (gridless call, full-array blocks).
    in_specs = [pl.BlockSpec(a.shape, lambda: (0, 0)) for a in inputs]

    half_relu_dim = d_out_true // 2 if last_layer_act == "ReLU" else None
    kernel = functools.partial(
        _fused_mlp_kernel, plan=prepped["plan"], half_relu_dim=half_relu_dim)

    out_bytes = batch * d_out_pad * jnp.dtype(out_dtype).itemsize
    out_padded = pl.pallas_call(
        kernel,
        out_shape=jax.ShapeDtypeStruct((batch, d_out_pad), out_dtype),
        in_specs=in_specs,
        out_specs=pl.BlockSpec((batch, d_out_pad), lambda: (0, 0)),
        compiler_params=pltpu.CompilerParams(
            vmem_limit_bytes=_vmem_limit_bytes(inputs, out_bytes)),
    )(*inputs)
    # TODO(synk): at production chemCPA widths, switch to a batch-tiled grid with a
    # 'parallel' M axis (two-phase BN: accumulate sum/sum-of-squares over an
    # 'arbitrary' axis, then normalize) so v7x's 2 TensorCores share the work,
    # with weights single-buffered via constant index_maps; at toy shapes the
    # single fused invocation is optimal.
    return out_padded[:, :d_out_true]


def mlp_forward_ref(x, params, *, batch_norm=True, last_layer_act="linear"):
    """Pure-JAX f32 reference (keeps the pre-BN bias; it cancels algebraically)."""
    n_layers = len(params)
    h = x
    for s, (w, b, gamma, beta) in enumerate(params):
        is_last = s == n_layers - 1
        y = h @ w + b
        if batch_norm and not is_last:
            mean = jnp.mean(y, axis=0, keepdims=True)
            var = jnp.mean((y - mean) ** 2, axis=0, keepdims=True)
            y = (y - mean) / jnp.sqrt(var + _BN_EPS) * gamma + beta
        if not is_last:
            y = jnp.maximum(y, 0.0)
        h = y
    if last_layer_act == "ReLU":
        dim = h.shape[1] // 2
        h = jnp.concatenate([jnp.maximum(h[:, :dim], 0.0), h[:, dim:]], axis=1)
    return h


def init_mlp_params(key, sizes):
    """Deterministic parameter init matching nn.Linear / nn.BatchNorm1d shapes."""
    params = []
    for s in range(len(sizes) - 1):
        d_in, d_out = sizes[s], sizes[s + 1]
        key, kw, kb = jax.random.split(key, 3)
        bound = 1.0 / jnp.sqrt(jnp.float32(d_in))
        w = jax.random.uniform(kw, (d_in, d_out), jnp.float32, -bound, bound)
        b = jax.random.uniform(kb, (1, d_out), jnp.float32, -bound, bound)
        gamma = jnp.ones((1, d_out), jnp.float32)   # BatchNorm1d weight init
        beta = jnp.zeros((1, d_out), jnp.float32)   # BatchNorm1d bias init
        params.append((w, b, gamma, beta))
    return params
    # TODO(synk): append_layer_width ('first'/'last') variants not instantiated;
    # they are the same Linear/BN/ReLU blocks and would extend `params`/`plan`.


if __name__ == "__main__":
    sizes = [16, 32, 32, 8]     # MLP(sizes=[16, 32, 32, 8], batch_norm=True)
    batch = 8
    last_layer_act = "ReLU"     # exercises the half-ReLU output path

    key = jax.random.PRNGKey(0)
    key, kx = jax.random.split(key)
    x = jax.random.normal(kx, (batch, sizes[0]), jnp.float32)
    params = init_mlp_params(key, sizes)

    prepped = prepare_mlp_params(params, batch_norm=True)      # one-time prep
    out = mlp_forward(x, prepped, last_layer_act=last_layer_act)
    out = jax.block_until_ready(out)
    assert out.shape == (batch, sizes[-1])

    ref = mlp_forward_ref(x, params, batch_norm=True, last_layer_act=last_layer_act)
    err = float(jnp.max(jnp.abs(out - ref)))
    assert err < 0.1, f"max abs error vs f32 reference too large: {err}"
    print("KERNEL_OK")
</pallas_src>

<mosaic_0001>
module attributes {stable_mosaic.version = 11 : i64} {
  func.func @_fused_mlp_kernel(%arg0: memref<8x16xf32, #tpu.memory_space<vmem>>, %arg1: memref<16x32xbf16, #tpu.memory_space<vmem>>, %arg2: memref<1x32xf32, #tpu.memory_space<vmem>>, %arg3: memref<1x32xf32, #tpu.memory_space<vmem>>, %arg4: memref<32x32xbf16, #tpu.memory_space<vmem>>, %arg5: memref<1x32xf32, #tpu.memory_space<vmem>>, %arg6: memref<1x32xf32, #tpu.memory_space<vmem>>, %arg7: memref<32x128xbf16, #tpu.memory_space<vmem>>, %arg8: memref<1x128xf32, #tpu.memory_space<vmem>>, %arg9: memref<8x128xf32, #tpu.memory_space<vmem>>) attributes {dimension_semantics = [], scalar_prefetch = 0 : i64, scratch_operands = 0 : i64, tpu.core_type = #tpu.core_type<tc>} {
    %c0 = arith.constant 0 : index
    %c0_0 = arith.constant 0 : index
    %0 = vector.load %arg0[%c0, %c0_0] : memref<8x16xf32, #tpu.memory_space<vmem>>, vector<8x16xf32>
    %c0_1 = arith.constant 0 : index
    %c0_2 = arith.constant 0 : index
    %1 = vector.load %arg1[%c0_1, %c0_2] : memref<16x32xbf16, #tpu.memory_space<vmem>>, vector<16x32xbf16>
    %2 = arith.truncf %0 : vector<8x16xf32> to vector<8x16xbf16>
    %cst = arith.constant dense<0.000000e+00> : vector<8x32xf32>
    %3 = tpu.matmul %2, %1, %cst {dimension_numbers = #tpu.dot_dimension_numbers<[1], [0], [0], [1], [0, 0, 1, 1], [], []>} : vector<8x16xbf16>, vector<16x32xbf16>, vector<8x32xf32> -> vector<8x32xf32>
    %c0_3 = arith.constant 0 : index
    %c0_4 = arith.constant 0 : index
    %4 = vector.load %arg2[%c0_3, %c0_4] : memref<1x32xf32, #tpu.memory_space<vmem>>, vector<1x32xf32>
    %c0_5 = arith.constant 0 : index
    %c0_6 = arith.constant 0 : index
    %5 = vector.load %arg3[%c0_5, %c0_6] : memref<1x32xf32, #tpu.memory_space<vmem>>, vector<1x32xf32>
    %cst_7 = arith.constant dense<0.000000e+00> : vector<32xf32>
    %6 = vector.multi_reduction <add>, %3, %cst_7 [0] : vector<8x32xf32> to vector<32xf32>
    %7 = vector.shape_cast %6 : vector<32xf32> to vector<1x32xf32>
    %cst_8 = arith.constant 8.000000e+00 : f32
    %8 = vector.broadcast %cst_8 : f32 to vector<1x32xf32>
    %9 = arith.divf %7, %8 : vector<1x32xf32>
    %10 = arith.mulf %3, %3 : vector<8x32xf32>
    %cst_9 = arith.constant dense<0.000000e+00> : vector<32xf32>
    %11 = vector.multi_reduction <add>, %10, %cst_9 [0] : vector<8x32xf32> to vector<32xf32>
    %12 = vector.shape_cast %11 : vector<32xf32> to vector<1x32xf32>
    %cst_10 = arith.constant 8.000000e+00 : f32
    %13 = vector.broadcast %cst_10 : f32 to vector<1x32xf32>
    %14 = arith.divf %12, %13 : vector<1x32xf32>
    %15 = arith.mulf %9, %9 : vector<1x32xf32>
    %16 = arith.subf %14, %15 : vector<1x32xf32>
    %cst_11 = arith.constant 0.000000e+00 : f32
    %17 = vector.broadcast %cst_11 : f32 to vector<1x32xf32>
    %18 = arith.maximumf %16, %17 : vector<1x32xf32>
    %cst_12 = arith.constant 9.99999974E-6 : f32
    %19 = vector.broadcast %cst_12 : f32 to vector<1x32xf32>
    %20 = arith.addf %18, %19 : vector<1x32xf32>
    %21 = math.rsqrt %20 : vector<1x32xf32>
    %22 = arith.mulf %4, %21 : vector<1x32xf32>
    %23 = arith.mulf %9, %22 : vector<1x32xf32>
    %24 = arith.subf %5, %23 : vector<1x32xf32>
    %25 = vector.broadcast %22 : vector<1x32xf32> to vector<8x32xf32>
    %26 = arith.mulf %3, %25 : vector<8x32xf32>
    %27 = vector.broadcast %24 : vector<1x32xf32> to vector<8x32xf32>
    %28 = arith.addf %26, %27 : vector<8x32xf32>
    %cst_13 = arith.constant 0.000000e+00 : f32
    %29 = vector.broadcast %cst_13 : f32 to vector<8x32xf32>
    %30 = arith.maximumf %28, %29 : vector<8x32xf32>
    %c0_14 = arith.constant 0 : index
    %c0_15 = arith.constant 0 : index
    %31 = vector.load %arg4[%c0_14, %c0_15] : memref<32x32xbf16, #tpu.memory_space<vmem>>, vector<32x32xbf16>
    %32 = arith.truncf %30 : vector<8x32xf32> to vector<8x32xbf16>
    %cst_16 = arith.constant dense<0.000000e+00> : vector<8x32xf32>
    %33 = tpu.matmul %32, %31, %cst_16 {dimension_numbers = #tpu.dot_dimension_numbers<[1], [0], [0], [1], [0, 0, 1, 1], [], []>} : vector<8x32xbf16>, vector<32x32xbf16>, vector<8x32xf32> -> vector<8x32xf32>
    %c0_17 = arith.constant 0 : index
    %c0_18 = arith.constant 0 : index
    %34 = vector.load %arg5[%c0_17, %c0_18] : memref<1x32xf32, #tpu.memory_space<vmem>>, vector<1x32xf32>
    %c0_19 = arith.constant 0 : index
    %c0_20 = arith.constant 0 : index
    %35 = vector.load %arg6[%c0_19, %c0_20] : memref<1x32xf32, #tpu.memory_space<vmem>>, vector<1x32xf32>
    %cst_21 = arith.constant dense<0.000000e+00> : vector<32xf32>
    %36 = vector.multi_reduction <add>, %33, %cst_21 [0] : vector<8x32xf32> to vector<32xf32>
    %37 = vector.shape_cast %36 : vector<32xf32> to vector<1x32xf32>
    %cst_22 = arith.constant 8.000000e+00 : f32
    %38 = vector.broadcast %cst_22 : f32 to vector<1x32xf32>
    %39 = arith.divf %37, %38 : vector<1x32xf32>
    %40 = arith.mulf %33, %33 : vector<8x32xf32>
    %cst_23 = arith.constant dense<0.000000e+00> : vector<32xf32>
    %41 = vector.multi_reduction <add>, %40, %cst_23 [0] : vector<8x32xf32> to vector<32xf32>
    %42 = vector.shape_cast %41 : vector<32xf32> to vector<1x32xf32>
    %cst_24 = arith.constant 8.000000e+00 : f32
    %43 = vector.broadcast %cst_24 : f32 to vector<1x32xf32>
    %44 = arith.divf %42, %43 : vector<1x32xf32>
    %45 = arith.mulf %39, %39 : vector<1x32xf32>
    %46 = arith.subf %44, %45 : vector<1x32xf32>
    %cst_25 = arith.constant 0.000000e+00 : f32
    %47 = vector.broadcast %cst_25 : f32 to vector<1x32xf32>
    %48 = arith.maximumf %46, %47 : vector<1x32xf32>
    %cst_26 = arith.constant 9.99999974E-6 : f32
    %49 = vector.broadcast %cst_26 : f32 to vector<1x32xf32>
    %50 = arith.addf %48, %49 : vector<1x32xf32>
    %51 = math.rsqrt %50 : vector<1x32xf32>
    %52 = arith.mulf %34, %51 : vector<1x32xf32>
    %53 = arith.mulf %39, %52 : vector<1x32xf32>
    %54 = arith.subf %35, %53 : vector<1x32xf32>
    %55 = vector.broadcast %52 : vector<1x32xf32> to vector<8x32xf32>
    %56 = arith.mulf %33, %55 : vector<8x32xf32>
    %57 = vector.broadcast %54 : vector<1x32xf32> to vector<8x32xf32>
    %58 = arith.addf %56, %57 : vector<8x32xf32>
    %cst_27 = arith.constant 0.000000e+00 : f32
    %59 = vector.broadcast %cst_27 : f32 to vector<8x32xf32>
    %60 = arith.maximumf %58, %59 : vector<8x32xf32>
    %c0_28 = arith.constant 0 : index
    %c0_29 = arith.constant 0 : index
    %61 = vector.load %arg7[%c0_28, %c0_29] : memref<32x128xbf16, #tpu.memory_space<vmem>>, vector<32x128xbf16>
    %62 = arith.truncf %60 : vector<8x32xf32> to vector<8x32xbf16>
    %cst_30 = arith.constant dense<0.000000e+00> : vector<8x128xf32>
    %63 = tpu.matmul %62, %61, %cst_30 {dimension_numbers = #tpu.dot_dimension_numbers<[1], [0], [0], [1], [0, 0, 1, 1], [], []>} : vector<8x32xbf16>, vector<32x128xbf16>, vector<8x128xf32> -> vector<8x128xf32>
    %c0_31 = arith.constant 0 : index
    %c0_32 = arith.constant 0 : index
    %64 = vector.load %arg8[%c0_31, %c0_32] : memref<1x128xf32, #tpu.memory_space<vmem>>, vector<1x128xf32>
    %65 = vector.broadcast %64 : vector<1x128xf32> to vector<8x128xf32>
    %66 = arith.addf %63, %65 : vector<8x128xf32>
    %67 = tpu.iota {dimensions = array<i32: 1>} : vector<1x128xi32>
    %c4_i32 = arith.constant 4 : i32
    %68 = vector.broadcast %c4_i32 : i32 to vector<1x128xi32>
    %69 = arith.cmpi slt, %67, %68 : vector<1x128xi32>
    %cst_33 = arith.constant 0.000000e+00 : f32
    %70 = vector.broadcast %cst_33 : f32 to vector<8x128xf32>
    %71 = arith.maximumf %66, %70 : vector<8x128xf32>
    %72 = vector.shape_cast %69 : vector<1x128xi1> to vector<1x128xi1>
    %73 = vector.broadcast %72 : vector<1x128xi1> to vector<8x128xi1>
    %74 = arith.select %73, %71, %66 : vector<8x128xi1>, vector<8x128xf32>
    %c0_34 = arith.constant 0 : index
    %c0_35 = arith.constant 0 : index
    %75 = vector.load %arg9[%c0_34, %c0_35] : memref<8x128xf32, #tpu.memory_space<vmem>>, vector<8x128xf32>
    tpu.vector_store %arg9[%c0_34, %c0_35], %74 {strides = array<i32>} : memref<8x128xf32, #tpu.memory_space<vmem>>, vector<8x128xf32>,
    return
  }
}

</mosaic_0001>

<llo_original>
// kernel: tpu_custom_call.1
$region0: #{tpu_custom_call.1}
  #allocation0 [shape = 'u32[]', space=smem, size = 0x4, offset = 0x4, fixed_abs, tag = 'smem constant byte address 0x4 - core index']
  #allocation1 [shape = 'u32[144,128]{1,0:T(1,128)}', space=vmem, size = 0x12000, scoped, tag = 'internal scratch']
  %s0 = inlined_call_operand.hbm [shape: f32[8,16], index: 0, kind: input, shape index: {}]
  %s1 = inlined_call_operand.hbm [shape: bf16[16,32], index: 1, kind: input, shape index: {}]
  %s2 = inlined_call_operand.vmem [shape: f32[1,32], index: 2, kind: input, shape index: {}]
  %s3 = inlined_call_operand.vmem [shape: f32[1,32], index: 3, kind: input, shape index: {}]
  %s4 = inlined_call_operand.hbm [shape: bf16[32,32], index: 4, kind: input, shape index: {}]
  %s5 = inlined_call_operand.vmem [shape: f32[1,32], index: 5, kind: input, shape index: {}]
  %s6 = inlined_call_operand.vmem [shape: f32[1,32], index: 6, kind: input, shape index: {}]
  %s7 = inlined_call_operand.hbm [shape: bf16[32,128], index: 7, kind: input, shape index: {}]
  %s8 = inlined_call_operand.vmem [shape: f32[1,128], index: 8, kind: input, shape index: {}]
  %s9 = inlined_call_operand.hbm [shape: f32[8,128], index: 9, kind: output, shape index: {}]
  %s10 = sld [smem:[#allocation0]]
  $region62: #{tpu_custom_call.1} parent=0
    _
  %s12 = ssub.s32 1, %s10
  %s13 = scalar_select 0, %s12, %s10
  $region1: #{tpu_custom_call.1} parent=0
    #allocation2 [shape = 'u8[4096]{0}', space=vmem, size = 0x1000, scoped, tag = 'input window, operand 0, single buffered']
    #allocation3 [shape = 's32[1]{0}', space=sflag, size = 0x4, scoped, tag = 'scoped memory for tpu_custom_call.1']
    #allocation4 [shape = 's32[1]{0}', space=sflag, size = 0x4, scoped, tag = 'scoped memory for tpu_custom_call.1']
    #allocation5 [shape = 'u8[4096]{0}', space=vmem, size = 0x1000, scoped, tag = 'input window, operand 1, single buffered']
    #allocation6 [shape = 's32[1]{0}', space=sflag, size = 0x4, scoped, tag = 'scoped memory for tpu_custom_call.1']
    #allocation7 [shape = 'u8[8192]{0}', space=vmem, size = 0x2000, scoped, tag = 'input window, operand 4, single buffered']
    #allocation8 [shape = 'u8[8192]{0}', space=vmem, size = 0x2000, scoped, tag = 'input window, operand 7, single buffered']
    #allocation9 [shape = 's32[1]{0}', space=sflag, size = 0x4, scoped, tag = 'scoped memory for tpu_custom_call.1']
    #allocation10 [shape = 'u8[4096]{0}', space=vmem, size = 0x1000, scoped, tag = 'output window, operand 0, single buffered']
    %14 = vsyncpa [#allocation3], 0
    %15 = vsyncpa [#allocation6], 0
    %16 = vsyncpa [#allocation9], 0
    %17 = vsyncpa [#allocation4], 0
    // Predicated region
    $region2: #{tpu_custom_call.1} parent=1 // pred_check
      _
    $region3: #{tpu_custom_call.1} parent=1 // pred_check_branch
      %19 = sbr.rel (0) target = $region5
    $region4: #{tpu_custom_call.1} parent=1 // pred_region
      %s21 = ssub.s32 128, 128
      %22 = vsyncadd [#allocation3], %s21
      %s24 = sshll.u32 [#allocation2], 4
      %s25 = int_to_ptr.vmem [resolvable:$true] %s24
      %27 = dma.hbm_to_vmem [thread:$0]  %s0, 128, %s25, [#allocation3]
    $region5: #{tpu_custom_call.1} parent=1 // pred_fallthru
      _
    // Predicated region
    $region6: #{tpu_custom_call.1} parent=1 // pred_check
      _
    $region7: #{tpu_custom_call.1} parent=1 // pred_check_branch
      %29 = sbr.rel (0) target = $region9
    $region8: #{tpu_custom_call.1} parent=1 // pred_region
      %s31 = ssub.s32 128, 128
      %32 = vsyncadd [#allocation6], %s31
      %s33 = sshll.u32 [#allocation5], 4
      %s34 = int_to_ptr.vmem [resolvable:$true] %s33
      %39 = dma.hbm_to_vmem [thread:$0]  %s1, 128, %s34, [#allocation6], 64, 64, 4
    $region9: #{tpu_custom_call.1} parent=1 // pred_fallthru
      _
    // Predicated region
    $region10: #{tpu_custom_call.1} parent=1 // pred_check
      _
    $region11: #{tpu_custom_call.1} parent=1 // pred_check_branch
      %41 = sbr.rel (0) target = $region13
    $region12: #{tpu_custom_call.1} parent=1 // pred_region
      _
    $region13: #{tpu_custom_call.1} parent=1 // pred_fallthru
      _
    // Predicated region
    $region14: #{tpu_custom_call.1} parent=1 // pred_check
      _
    $region15: #{tpu_custom_call.1} parent=1 // pred_check_branch
      %43 = sbr.rel (0) target = $region17
    $region16: #{tpu_custom_call.1} parent=1 // pred_region
      _
    $region17: #{tpu_custom_call.1} parent=1 // pred_fallthru
      _
    // Predicated region
    $region18: #{tpu_custom_call.1} parent=1 // pred_check
      _
    $region19: #{tpu_custom_call.1} parent=1 // pred_check_branch
      %45 = sbr.rel (0) target = $region21
    $region20: #{tpu_custom_call.1} parent=1 // pred_region
      %s47 = ssub.s32 256, 256
      %48 = vsyncadd [#allocation6], %s47
      %s49 = sshll.u32 [#allocation7], 4
      %s50 = int_to_ptr.vmem [resolvable:$true] %s49
      %55 = dma.hbm_to_vmem [thread:$0]  %s4, 256, %s50, [#allocation6], 64, 64, 4
    $region21: #{tpu_custom_call.1} parent=1 // pred_fallthru
      _
    // Predicated region
    $region22: #{tpu_custom_call.1} parent=1 // pred_check
      _
    $region23: #{tpu_custom_call.1} parent=1 // pred_check_branch
      %57 = sbr.rel (0) target = $region25
    $region24: #{tpu_custom_call.1} parent=1 // pred_region
      _
    $region25: #{tpu_custom_call.1} parent=1 // pred_fallthru
      _
    // Predicated region
    $region26: #{tpu_custom_call.1} parent=1 // pred_check
      _
    $region27: #{tpu_custom_call.1} parent=1 // pred_check_branch
      %59 = sbr.rel (0) target = $region29
    $region28: #{tpu_custom_call.1} parent=1 // pred_region
      _
    $region29: #{tpu_custom_call.1} parent=1 // pred_fallthru
      _
    // Predicated region
    $region30: #{tpu_custom_call.1} parent=1 // pred_check
      _
    $region31: #{tpu_custom_call.1} parent=1 // pred_check_branch
      %61 = sbr.rel (0) target = $region33
    $region32: #{tpu_custom_call.1} parent=1 // pred_region
      %s63 = ssub.s32 256, 256
      %64 = vsyncadd [#allocation9], %s63
      %s65 = sshll.u32 [#allocation8], 4
      %s66 = int_to_ptr.vmem [resolvable:$true] %s65
      %71 = dma.hbm_to_vmem [thread:$0]  %s7, 256, %s66, [#allocation9], 64, 64, 4
    $region33: #{tpu_custom_call.1} parent=1 // pred_fallthru
      _
    // Predicated region
    $region34: #{tpu_custom_call.1} parent=1 // pred_check
      _
    $region35: #{tpu_custom_call.1} parent=1 // pred_check_branch
      %73 = sbr.rel (0) target = $region37
    $region36: #{tpu_custom_call.1} parent=1 // pred_region
      _
    $region37: #{tpu_custom_call.1} parent=1 // pred_fallthru
      _
    // Predicated region
    $region38: #{tpu_custom_call.1} parent=1 // pred_check
      _
    $region39: #{tpu_custom_call.1} parent=1 // pred_check_branch
      %75 = sbr.rel (0) target = $region41
    $region40: #{tpu_custom_call.1} parent=1 // pred_region
      %76 = dma.done [#allocation3], 128
    $region41: #{tpu_custom_call.1} parent=1 // pred_fallthru
      _
    // Predicated region
    $region42: #{tpu_custom_call.1} parent=1 // pred_check
      _
    $region43: #{tpu_custom_call.1} parent=1 // pred_check_branch
      %78 = sbr.rel (0) target = $region45
    $region44: #{tpu_custom_call.1} parent=1 // pred_region
      %79 = dma.done [#allocation6], 128
    $region45: #{tpu_custom_call.1} parent=1 // pred_fallthru
      _
    // Predicated region
    $region46: #{tpu_custom_call.1} parent=1 // pred_check
      _
    $region47: #{tpu_custom_call.1} parent=1 // pred_check_branch
      %81 = sbr.rel (0) target = $region49
    $region48: #{tpu_custom_call.1} parent=1 // pred_region
      %82 = dma.done [#allocation6], 256
    $region49: #{tpu_custom_call.1} parent=1 // pred_fallthru
      _
    // Predicated region
    $region50: #{tpu_custom_call.1} parent=1 // pred_check
      _
    $region51: #{tpu_custom_call.1} parent=1 // pred_check_branch
      %84 = sbr.rel (0) target = $region53
    $region52: #{tpu_custom_call.1} parent=1 // pred_region
      %85 = dma.done [#allocation9], 256
    $region53: #{tpu_custom_call.1} parent=1 // pred_fallthru
      _
    %v87 = vld [vmem:[#allocation2] sm:$0xff]
    %v88 = vld [vmem:[#allocation5] sm:$0xf]
    %v89 = vld [vmem:[#allocation5 + $0x4] sm:$0xf]
    %v90 = vpack.c.bf16 %v87, %v87
    %v93 = vunpack.c.l.b16 %v88
    %v94 = vunpack.c.l.b16 %v89
    %v95 = vpack.c.b16 %v94, %v93
    %vm97 = vcmask 130048
    %v99 = vsel %vm97, %v90, 0
    %101 = vmatprep.subr.bf16.mxu0 0
    %102 = vmatpush1.bf16.msra.mxu0 0
    %103 = vmatprep.subr.bf16.mxu0 0
    %104 = vmatpush1.bf16.msra.mxu0 0
    %105 = vmatprep.subr.bf16.mxu0 0
    %106 = vmatpush1.bf16.msra.mxu0 0
    %107 = vmatprep.subr.bf16.mxu0 0
    %108 = vmatpush1.bf16.msra.mxu0 0
    %109 = vmatprep.subr.bf16.mxu0 0
    %110 = vmatpush1.bf16.msra.mxu0 0
    %111 = vmatprep.subr.bf16.mxu0 0
    %112 = vmatpush1.bf16.msra.mxu0 0
    %113 = vmatprep.subr.bf16.mxu0 0
    %114 = vmatpush1.bf16.msra.mxu0 0
    %115 = vmatprep.subr.bf16.mxu0 0
    %116 = vmatpush1.bf16.msra.mxu0 %v95
    %117 = vmatprep.subr.bf16.mxu0 0
    %118 = vmatpush2.bf16.msra.mxu0 0
    %119 = vmatprep.subr.bf16.mxu0 0
    %120 = vmatpush2.bf16.msra.mxu0 0
    %121 = vmatprep.subr.bf16.mxu0 0
    %122 = vmatpush2.bf16.msra.mxu0 0
    %123 = vmatprep.subr.bf16.mxu0 0
    %124 = vmatpush2.bf16.msra.mxu0 0
    %125 = vmatprep.subr.bf16.mxu0 0
    %126 = vmatpush2.bf16.msra.mxu0 0
    %127 = vmatprep.subr.bf16.mxu0 0
    %128 = vmatpush2.bf16.msra.mxu0 0
    %129 = vmatprep.subr.bf16.mxu0 0
    %130 = vmatpush2.bf16.msra.mxu0 0
    %131 = vmatprep.subr.bf16.mxu0 0
    %132 = vmatpush2.bf16.msra.mxu0 0
    %133 = vmatprep.mubr.bf16.mxu0 0
    %134 = vmatmul.mubr.bf16.gmra.mxu0 %v99
    %v135 = vpop.f32.mrf.mxu0
    %v136 = vadd.f32 0.0, %v135
    %v137 = vpop.f32.mrf.mxu0
    %v138 = vpop.f32.mrf.mxu0
    %v139 = vpop.f32.mrf.mxu0
    %140 = vdwg.mxu0
    %v141 = vld [vmem:[%s2] sm:$0x1]
    %v142 = vld [vmem:[%s3] sm:$0x1]
    %vm143 = vcmask 261120
    %v144 = vsel %vm143, %v136, 0.0
    %v145 = vrot.slane %v144, 4
    %v146 = vadd.f32 %v144, %v145
    %v147 = vrot.slane %v146, 2
    %v148 = vadd.f32 %v146, %v147
    %v149 = vrot.slane %v148, 1
    %v150 = vadd.f32 %v148, %v149
    %v151 = vrcp.pop 8.0
    %v152 = vmul.f32 %v150, %v151
    %v153 = vmul.f32 %v136, %v136
    %v154 = vsel %vm143, %v153, 0.0
    %v155 = vrot.slane %v154, 4
    %v156 = vadd.f32 %v154, %v155
    %v157 = vrot.slane %v156, 2
    %v158 = vadd.f32 %v156, %v157
    %v159 = vrot.slane %v158, 1
    %v160 = vadd.f32 %v158, %v159
    %v161 = vmul.f32 %v160, %v151
    %v162 = vmul.f32 %v152, %v152
    %v163 = vsub.f32 %v161, %v162
    %v164 = vmax.f32 %v163, 0.0
    %v165 = vadd.f32 %v164, 1e-05
    %v166 = vrsqrt.pop %v165
    %v167 = vmul.f32 %v141, %v166
    %v168 = vmul.f32 %v152, %v167
    %v169 = vsub.f32 %v142, %v168
    %v171 = vlaneseq
    %v172 = vshrl.u32 %v171, 7
    %v173 = vsub.s32 0, %v172
    %v174 = vrot.slane %v167, %v173
    %v176 = vmul.f32 %v136, %v174
    %v178 = vlaneseq
    %v179 = vshrl.u32 %v178, 7
    %v180 = vsub.s32 0, %v179
    %v181 = vrot.slane %v169, %v180
    %v183 = vadd.f32 %v176, %v181
    %v184 = vmax.f32 %v183, 0.0
    %v185 = vld [vmem:[#allocation7] sm:$0xf]
    %v186 = vld [vmem:[#allocation7 + $0x4] sm:$0xf]
    %v187 = vld [vmem:[#allocation7 + $0x8] sm:$0xf]
    %v188 = vld [vmem:[#allocation7 + $0xc] sm:$0xf]
    %v189 = vpack.c.bf16 %v184, %v184
    %v194 = vunpack.c.l.b16 %v185
    %v195 = vunpack.c.l.b16 %v186
    %v196 = vunpack.c.l.b16 %v187
    %v197 = vunpack.c.l.b16 %v188
    %v198 = vpack.c.b16 %v195, %v194
    %v199 = vpack.c.b16 %v197, %v196
    %v203 = vsel %vm143, %v189, 0
    %205 = vmatprep.subr.bf16.mxu0 0
    %206 = vmatpush1.bf16.msra.mxu0 0
    %207 = vmatprep.subr.bf16.mxu0 0
    %208 = vmatpush1.bf16.msra.mxu0 0
    %209 = vmatprep.subr.bf16.mxu0 0
    %210 = vmatpush1.bf16.msra.mxu0 0
    %211 = vmatprep.subr.bf16.mxu0 0
    %212 = vmatpush1.bf16.msra.mxu0 0
    %213 = vmatprep.subr.bf16.mxu0 0
    %214 = vmatpush1.bf16.msra.mxu0 0
    %215 = vmatprep.subr.bf16.mxu0 0
    %216 = vmatpush1.bf16.msra.mxu0 0
    %217 = vmatprep.subr.bf16.mxu0 0
    %218 = vmatpush1.bf16.msra.mxu0 %v199
    %219 = vmatprep.subr.bf16.mxu0 0
    %220 = vmatpush1.bf16.msra.mxu0 %v198
    %221 = vmatprep.subr.bf16.mxu0 0
    %222 = vmatpush2.bf16.msra.mxu0 0
    %223 = vmatprep.subr.bf16.mxu0 0
    %224 = vmatpush2.bf16.msra.mxu0 0
    %225 = vmatprep.subr.bf16.mxu0 0
    %226 = vmatpush2.bf16.msra.mxu0 0
    %227 = vmatprep.subr.bf16.mxu0 0
    %228 = vmatpush2.bf16.msra.mxu0 0
    %229 = vmatprep.subr.bf16.mxu0 0
    %230 = vmatpush2.bf16.msra.mxu0 0
    %231 = vmatprep.subr.bf16.mxu0 0
    %232 = vmatpush2.bf16.msra.mxu0 0
    %233 = vmatprep.subr.bf16.mxu0 0
    %234 = vmatpush2.bf16.msra.mxu0 0
    %235 = vmatprep.subr.bf16.mxu0 0
    %236 = vmatpush2.bf16.msra.mxu0 0
    %237 = vmatprep.mubr.bf16.mxu0 0
    %238 = vmatmul.mubr.bf16.gmra.mxu0 %v203
    %v239 = vpop.f32.mrf.mxu0
    %v240 = vadd.f32 0.0, %v239
    %v241 = vpop.f32.mrf.mxu0
    %v242 = vpop.f32.mrf.mxu0
    %v243 = vpop.f32.mrf.mxu0
    %244 = vdwg.mxu0
    %v245 = vld [vmem:[%s5] sm:$0x1]
    %v246 = vld [vmem:[%s6] sm:$0x1]
    %v247 = vsel %vm143, %v240, 0.0
    %v248 = vrot.slane %v247, 4
    %v249 = vadd.f32 %v247, %v248
    %v250 = vrot.slane %v249, 2
    %v251 = vadd.f32 %v249, %v250
    %v252 = vrot.slane %v251, 1
    %v253 = vadd.f32 %v251, %v252
    %v254 = vmul.f32 %v253, %v151
    %v255 = vmul.f32 %v240, %v240
    %v256 = vsel %vm143, %v255, 0.0
    %v257 = vrot.slane %v256, 4
    %v258 = vadd.f32 %v256, %v257
    %v259 = vrot.slane %v258, 2
    %v260 = vadd.f32 %v258, %v259
    %v261 = vrot.slane %v260, 1
    %v262 = vadd.f32 %v260, %v261
    %v263 = vmul.f32 %v262, %v151
    %v264 = vmul.f32 %v254, %v254
    %v265 = vsub.f32 %v263, %v264
    %v266 = vmax.f32 %v265, 0.0
    %v267 = vadd.f32 %v266, 1e-05
    %v268 = vrsqrt.pop %v267
    %v269 = vmul.f32 %v245, %v268
    %v270 = vmul.f32 %v254, %v269
    %v271 = vsub.f32 %v246, %v270
    %v273 = vlaneseq
    %v274 = vshrl.u32 %v273, 7
    %v275 = vsub.s32 0, %v274
    %v276 = vrot.slane %v269, %v275
    %v278 = vmul.f32 %v240, %v276
    %v280 = vlaneseq
    %v281 = vshrl.u32 %v280, 7
    %v282 = vsub.s32 0, %v281
    %v283 = vrot.slane %v271, %v282
    %v285 = vadd.f32 %v278, %v283
    %v286 = vmax.f32 %v285, 0.0
    %v287 = vld [vmem:[#allocation8] sm:$0xf]
    %v288 = vld [vmem:[#allocation8 + $0x4] sm:$0xf]
    %v289 = vld [vmem:[#allocation8 + $0x8] sm:$0xf]
    %v290 = vld [vmem:[#allocation8 + $0xc] sm:$0xf]
    %v291 = vpack.c.bf16 %v286, %v286
    %v292 = vld [vmem:[%s8] sm:$0x1]
    %v294 = vlaneseq
    %v295 = vshrl.u32 %v294, 7
    %v296 = vsub.s32 0, %v295
    %v297 = vrot.slane %v292, %v296
    %v303 = vunpack.c.l.b16 %v287
    %v304 = vunpack.c.l.b16 %v288
    %v305 = vunpack.c.l.b16 %v289
    %v306 = vunpack.c.l.b16 %v290
    %v307 = vpack.c.b16 %v304, %v303
    %v308 = vpack.c.b16 %v306, %v305
    %v312 = vsel %vm143, %v291, 0
    %314 = vmatprep.subr.bf16.mxu0 0
    %315 = vmatpush1.bf16.msra.mxu0 0
    %316 = vmatprep.subr.bf16.mxu0 0
    %317 = vmatpush1.bf16.msra.mxu0 0
    %318 = vmatprep.subr.bf16.mxu0 0
    %319 = vmatpush1.bf16.msra.mxu0 0
    %320 = vmatprep.subr.bf16.mxu0 0
    %321 = vmatpush1.bf16.msra.mxu0 0
    %322 = vmatprep.subr.bf16.mxu0 0
    %323 = vmatpush1.bf16.msra.mxu0 0
    %324 = vmatprep.subr.bf16.mxu0 0
    %325 = vmatpush1.bf16.msra.mxu0 0
    %326 = vmatprep.subr.bf16.mxu0 0
    %327 = vmatpush1.bf16.msra.mxu0 %v308
    %328 = vmatprep.subr.bf16.mxu0 0
    %329 = vmatpush1.bf16.msra.mxu0 %v307
    %330 = vmatprep.subr.bf16.mxu0 0
    %331 = vmatpush2.bf16.msra.mxu0 0
    %332 = vmatprep.subr.bf16.mxu0 0
    %333 = vmatpush2.bf16.msra.mxu0 0
    %334 = vmatprep.subr.bf16.mxu0 0
    %335 = vmatpush2.bf16.msra.mxu0 0
    %336 = vmatprep.subr.bf16.mxu0 0
    %337 = vmatpush2.bf16.msra.mxu0 0
    %338 = vmatprep.subr.bf16.mxu0 0
    %339 = vmatpush2.bf16.msra.mxu0 0
    %340 = vmatprep.subr.bf16.mxu0 0
    %341 = vmatpush2.bf16.msra.mxu0 0
    %342 = vmatprep.subr.bf16.mxu0 0
    %343 = vmatpush2.bf16.msra.mxu0 0
    %344 = vmatprep.subr.bf16.mxu0 0
    %345 = vmatpush2.bf16.msra.mxu0 0
    %346 = vmatprep.mubr.bf16.mxu0 0
    %347 = vmatmul.mubr.bf16.gmra.mxu0 %v312
    %v348 = vpop.f32.mrf.mxu0
    %v349 = vadd.f32 %v297, %v348
    %v350 = vpop.f32.mrf.mxu0
    %v351 = vpop.f32.mrf.mxu0
    %v352 = vpop.f32.mrf.mxu0
    %353 = vdwg.mxu0
    %v354 = vlaneseq
    %v355 = vand.u32 %v354, 127
    %vm356 = vcmp.lt.s32.totalorder %v355, 4
    %v357 = vmax.f32 %v349, 0.0
    %v358 = vsel %vm356, 1, 0
    %vm359 = vcmp.eq.s32.totalorder %v358, 1
    %v360 = vsel %vm359, %v357, %v349
    %361 = vst [vmem:[#allocation10] sm:$0xff] %v360
    // Predicated region
    $region54: #{tpu_custom_call.1} parent=1 // pred_check
      _
    $region55: #{tpu_custom_call.1} parent=1 // pred_check_branch
      %363 = sbr.rel (0) target = $region57
    $region56: #{tpu_custom_call.1} parent=1 // pred_region
      %s365 = ssub.s32 128, 128
      %366 = vsyncadd [#allocation4], %s365
      %s368 = sshll.u32 [#allocation10], 4
      %s369 = int_to_ptr.vmem [resolvable:$true] %s368
      %371 = dma.vmem_to_hbm [thread:$0]  %s369, 128, %s9, [#allocation4]
    $region57: #{tpu_custom_call.1} parent=1 // pred_fallthru
      _
    // Predicated region
    $region58: #{tpu_custom_call.1} parent=1 // pred_check
      _
    $region59: #{tpu_custom_call.1} parent=1 // pred_check_branch
      %373 = sbr.rel (0) target = $region61
    $region60: #{tpu_custom_call.1} parent=1 // pred_region
      %374 = dma.done [#allocation4], 128
    $region61: #{tpu_custom_call.1} parent=1 // pred_fallthru
      _
    %375 = vsyncpa [#allocation3], 1
    %376 = vsyncpa [#allocation6], 1
    %377 = vsyncpa [#allocation9], 1
    %378 = vsyncpa [#allocation4], 1

</llo_original>
